<compile_context>
chip_gen: v7x
topology: tpu7x:2x2x1
jax: 0.10.0
libtpu: 0.0.40
codegen_flags: <defaults>
</compile_context>

<pallas_src>
import math

import jax
import jax.numpy as jnp
from jax.experimental import pallas as pl
from jax.experimental.pallas import tpu as pltpu

# ----------------------------- small synthetic config -----------------------------
BATCH = 2
SEQ = 8
HIDDEN = 32
NUM_HEADS = 4
HEAD_DIM = HIDDEN // NUM_HEADS
INTERMEDIATE = 64
VOCAB = 100
MAX_POS = 64
PAD_IDX = 1          # RoBERTa padding_idx
LN_EPS = 1e-5        # RoBERTa layer_norm_eps
NUM_LAYERS = 2


def _layer_norm(x, gamma, beta, eps):
    mean = jnp.mean(x, axis=-1, keepdims=True)
    var = jnp.mean(jnp.square(x - mean), axis=-1, keepdims=True)
    return (x - mean) * jax.lax.rsqrt(var + eps) * gamma + beta


# ----------------------------- Pallas kernels -----------------------------
def embeddings_kernel(ids_ref, pos_ref, wtab_ref, ptab_ref, ttab_ref, g_ref, b_ref, out_ref):
    # word/position embedding gathers done in-kernel as one-hot matmuls (MXU); token_type_ids = 0.
    bs = ids_ref.shape[0]
    vocab = wtab_ref.shape[0]
    max_pos = ptab_ref.shape[0]
    ids = ids_ref[...]            # (B*S, 1) int32
    pos = pos_ref[...]            # (B*S, 1) int32
    w_oh = (jax.lax.broadcasted_iota(jnp.int32, (bs, vocab), 1) == ids).astype(jnp.float32)
    p_oh = (jax.lax.broadcasted_iota(jnp.int32, (bs, max_pos), 1) == pos).astype(jnp.float32)
    # TODO(synk): at real vocab sizes replace the one-hot matmul with a DMA row-gather
    # (PrefetchScalarGridSpec + pl.Element / make_async_copy); at VOCAB=100 the matmul is cheaper.
    x = (jnp.dot(w_oh, wtab_ref[...], preferred_element_type=jnp.float32)
         + jnp.dot(p_oh, ptab_ref[...], preferred_element_type=jnp.float32)
         + ttab_ref[...])                                  # (B*S, H)
    y = _layer_norm(x, g_ref[...], b_ref[...], LN_EPS)
    out_ref[...] = y.reshape(out_ref.shape)                # lane dim (H) unchanged by reshape


def encoder_layers_kernel(mask_ref, h0_ref,
                          wqkv_ref, bqkv_ref, wo_ref, bo_ref, ln1_g_ref, ln1_b_ref,
                          wi_ref, bi_ref, w2_ref, b2_ref, ln2_g_ref, ln2_b_ref,
                          out_ref, h_scr, ctx_scr):
    # grid axis 0 = layer index; hidden state lives in h_scr (VMEM) across layers.
    l = pl.program_id(0)

    @pl.when(l == 0)
    def _():
        h_scr[...] = h0_ref[...].reshape(BATCH * SEQ, HIDDEN)

    x = h_scr[...]                                         # (B*S, H), sublane-dense rows

    # --- fused QKV projection: one MXU pass with N = 3H ---
    qkv = jnp.dot(x, wqkv_ref[0], preferred_element_type=jnp.float32) + bqkv_ref[0]   # (B*S, 3H)
    q = qkv[:, 0 * HIDDEN:1 * HIDDEN].reshape(BATCH, SEQ, HIDDEN)
    k = qkv[:, 1 * HIDDEN:2 * HIDDEN].reshape(BATCH, SEQ, HIDDEN)
    v = qkv[:, 2 * HIDDEN:3 * HIDDEN].reshape(BATCH, SEQ, HIDDEN)

    scale = 1.0 / math.sqrt(HEAD_DIM)
    # mask broadcast hoisted out of the head loop (JAX does not CSE broadcast_in_dim)
    add_mask = jnp.broadcast_to(mask_ref[...][:, None, :], (BATCH, SEQ, SEQ))

    # per-head attention; heads write disjoint lane slices of ctx_scr (no concatenate).
    for hidx in range(NUM_HEADS):                          # static unroll, NUM_HEADS = 4
        sl = slice(hidx * HEAD_DIM, (hidx + 1) * HEAD_DIM)
        qh, kh, vh = q[:, :, sl], k[:, :, sl], v[:, :, sl]            # (B, S, HD)
        s = jnp.einsum('bqd,bkd->bqk', qh, kh,
                       preferred_element_type=jnp.float32) * scale    # (B, Sq, Sk)
        s = s + add_mask
        s = s - jnp.max(s, axis=-1, keepdims=True)
        p = jnp.exp(s)
        inv = pl.reciprocal(jnp.sum(p, axis=-1, keepdims=True), approx=True)   # EUP, (B,Sq,1)
        ctx_h = jnp.einsum('bqk,bkd->bqd', p, vh,
                           preferred_element_type=jnp.float32)         # (B, Sq, HD)
        ctx_scr[:, sl] = (ctx_h * inv).reshape(BATCH * SEQ, HEAD_DIM)  # scale small ctx, not p

    ctx = ctx_scr[...]                                     # (B*S, H)

    # attention output dense + residual + LayerNorm
    attn = jnp.dot(ctx, wo_ref[0], preferred_element_type=jnp.float32) + bo_ref[0]
    h1 = _layer_norm(attn + x, ln1_g_ref[0], ln1_b_ref[0], LN_EPS)

    # feed-forward: intermediate dense + exact (erf) GELU, output dense + residual + LayerNorm
    inter = jnp.dot(h1, wi_ref[0], preferred_element_type=jnp.float32) + bi_ref[0]
    inter = jax.nn.gelu(inter, approximate=False)
    ffn = jnp.dot(inter, w2_ref[0], preferred_element_type=jnp.float32) + b2_ref[0]
    h2 = _layer_norm(ffn + h1, ln2_g_ref[0], ln2_b_ref[0], LN_EPS)

    h_scr[...] = h2                                        # carry hidden state to next layer

    @pl.when(l == pl.num_programs(0) - 1)
    def _():
        out_ref[...] = h2.reshape(BATCH, SEQ, HIDDEN)


# ----------------------------- wrappers -----------------------------
def run_embeddings(input_ids, p):
    # torch: inp = inp.view(-1, input_shape[-1])
    ids = input_ids.reshape(-1, input_ids.shape[-1])
    # RoBERTa position ids: pad_idx + cumsum(non-pad mask) (tiny int math; done in wrapper)
    nonpad = (ids != PAD_IDX).astype(jnp.int32)
    pos_ids = jnp.cumsum(nonpad, axis=-1) * nonpad + PAD_IDX
    b, s = ids.shape
    ids_col = ids.reshape(b * s, 1).astype(jnp.int32)
    pos_col = pos_ids.reshape(b * s, 1).astype(jnp.int32)
    args = (ids_col, pos_col, p['word_emb'], p['pos_emb'], p['type_emb'], p['ln_g'], p['ln_b'])
    return pl.pallas_call(
        embeddings_kernel,
        out_shape=jax.ShapeDtypeStruct((b, s, HIDDEN), jnp.float32),
        in_specs=[pl.BlockSpec(memory_space=pltpu.MemorySpace.VMEM) for _ in args],
        out_specs=pl.BlockSpec(memory_space=pltpu.MemorySpace.VMEM),
    )(*args)


def _wspec(arr):
    # stacked per-layer parameter (L, d1, d2): one layer's slab per grid step
    return pl.BlockSpec((1,) + arr.shape[1:], lambda l: (l, 0, 0))


def run_encoder_layers(hidden, add_mask, st):
    """Run all layers in `st` (stacked params, leading axis = layer) in ONE pallas_call."""
    num_layers = st['wqkv'].shape[0]
    grid_spec = pltpu.PrefetchScalarGridSpec(
        num_scalar_prefetch=0,
        grid=(num_layers,),
        in_specs=[
            pl.BlockSpec(add_mask.shape, lambda l: (0, 0)),
            pl.BlockSpec(hidden.shape, lambda l: (0, 0, 0)),
            _wspec(st['wqkv']), _wspec(st['bqkv']),
            _wspec(st['wo']), _wspec(st['bo']),
            _wspec(st['ln1_g']), _wspec(st['ln1_b']),
            _wspec(st['wi']), _wspec(st['bi']),
            _wspec(st['w2']), _wspec(st['b2']),
            _wspec(st['ln2_g']), _wspec(st['ln2_b']),
        ],
        out_specs=pl.BlockSpec(hidden.shape, lambda l: (0, 0, 0)),   # resident across layer axis
        scratch_shapes=[pltpu.VMEM((BATCH * SEQ, HIDDEN), jnp.float32),   # hidden-state carry
                        pltpu.VMEM((BATCH * SEQ, HIDDEN), jnp.float32)],  # per-layer context
    )
    return pl.pallas_call(
        encoder_layers_kernel,
        out_shape=jax.ShapeDtypeStruct(hidden.shape, jnp.float32),
        grid_spec=grid_spec,
        compiler_params=pltpu.CompilerParams(dimension_semantics=("arbitrary",)),
    )(add_mask, hidden, st['wqkv'], st['bqkv'], st['wo'], st['bo'],
      st['ln1_g'], st['ln1_b'], st['wi'], st['bi'], st['w2'], st['b2'],
      st['ln2_g'], st['ln2_b'])


def _stack_blocks(blocks):
    st = {
        'wqkv': jnp.stack([jnp.concatenate([b['wq'], b['wk'], b['wv']], axis=-1) for b in blocks]),
        'bqkv': jnp.stack([jnp.concatenate([b['bq'], b['bk'], b['bv']], axis=-1) for b in blocks]),
    }
    for k in ('wo', 'bo', 'ln1_g', 'ln1_b', 'wi', 'bi', 'w2', 'b2', 'ln2_g', 'ln2_b'):
        st[k] = jnp.stack([b[k] for b in blocks])
    return st


class LayerRobertaPallas:
    """Pallas equivalent of LayerRoberta.forward(layer_num, inp, attn_masks)."""

    def __init__(self, params):
        self.params = params
        self.stacked = _stack_blocks(params['blocks'])     # (L, ...) stacked block weights

    @staticmethod
    def _ext_mask(attn_masks):
        # BERT get_extended_attention_mask: (1 - mask) * finfo(dtype).min, broadcast over heads/query
        return (1.0 - attn_masks.astype(jnp.float32)) * jnp.finfo(jnp.float32).min

    def __call__(self, layer_num, inp, attn_masks):
        if layer_num == 0:
            return run_embeddings(inp, self.params['emb'])
        blk = {k: v[layer_num - 1:layer_num] for k, v in self.stacked.items()}   # grid=(1,)
        return run_encoder_layers(inp, self._ext_mask(attn_masks), blk)

    def forward_all(self, input_ids, attn_masks):
        # fused fast path: embeddings + all encoder layers, hidden kept VMEM-resident across layers
        h = run_embeddings(input_ids, self.params['emb'])
        return run_encoder_layers(h, self._ext_mask(attn_masks), self.stacked)


# ----------------------------- deterministic parameter init -----------------------------
def init_params(key):
    def dense(k, shape):
        return 0.02 * jax.random.normal(k, shape, jnp.float32)

    keys = iter(jax.random.split(key, 64))
    emb = dict(
        word_emb=dense(next(keys), (VOCAB, HIDDEN)),
        pos_emb=dense(next(keys), (MAX_POS, HIDDEN)),
        type_emb=dense(next(keys), (1, HIDDEN)),
        ln_g=jnp.ones((1, HIDDEN), jnp.float32),
        ln_b=jnp.zeros((1, HIDDEN), jnp.float32),
    )
    blocks = []
    for _ in range(NUM_LAYERS):
        blocks.append(dict(
            wq=dense(next(keys), (HIDDEN, HIDDEN)), bq=dense(next(keys), (1, HIDDEN)),
            wk=dense(next(keys), (HIDDEN, HIDDEN)), bk=dense(next(keys), (1, HIDDEN)),
            wv=dense(next(keys), (HIDDEN, HIDDEN)), bv=dense(next(keys), (1, HIDDEN)),
            wo=dense(next(keys), (HIDDEN, HIDDEN)), bo=dense(next(keys), (1, HIDDEN)),
            ln1_g=jnp.ones((1, HIDDEN), jnp.float32), ln1_b=jnp.zeros((1, HIDDEN), jnp.float32),
            wi=dense(next(keys), (HIDDEN, INTERMEDIATE)), bi=dense(next(keys), (1, INTERMEDIATE)),
            w2=dense(next(keys), (INTERMEDIATE, HIDDEN)), b2=dense(next(keys), (1, HIDDEN)),
            ln2_g=jnp.ones((1, HIDDEN), jnp.float32), ln2_b=jnp.zeros((1, HIDDEN), jnp.float32),
        ))
    return dict(emb=emb, blocks=blocks)


if __name__ == "__main__":
    key = jax.random.PRNGKey(0)
    pkey, ikey = jax.random.split(key)
    params = init_params(pkey)
    model = LayerRobertaPallas(params)

    # deterministic example inputs
    input_ids = jax.random.randint(ikey, (BATCH, SEQ), 2, VOCAB, dtype=jnp.int32)
    attn_masks = jnp.ones((BATCH, SEQ), jnp.float32)

    # per-layer path (matches LayerRoberta's call-per-layer semantics)
    h = model(0, input_ids, attn_masks)
    h = jax.block_until_ready(h)
    assert h.shape == (BATCH, SEQ, HIDDEN)
    for ln in range(1, NUM_LAYERS + 1):
        h = model(ln, h, attn_masks)
    h = jax.block_until_ready(h)
    assert h.shape == (BATCH, SEQ, HIDDEN)
    assert bool(jnp.all(jnp.isfinite(h)))

    # fused fast path: single pallas_call over all encoder layers (hidden stays in VMEM)
    h_fused = jax.block_until_ready(model.forward_all(input_ids, attn_masks))
    assert h_fused.shape == (BATCH, SEQ, HIDDEN)
    assert bool(jnp.allclose(h, h_fused, atol=1e-4, rtol=1e-4))

    print("KERNEL_OK")
</pallas_src>

<mosaic_0001>
module attributes {stable_mosaic.version = 11 : i64} {
  func.func @embeddings_kernel(%arg0: memref<16x1xi32, #tpu.memory_space<vmem>>, %arg1: memref<16x1xi32, #tpu.memory_space<vmem>>, %arg2: memref<100x32xf32, #tpu.memory_space<vmem>>, %arg3: memref<64x32xf32, #tpu.memory_space<vmem>>, %arg4: memref<1x32xf32, #tpu.memory_space<vmem>>, %arg5: memref<1x32xf32, #tpu.memory_space<vmem>>, %arg6: memref<1x32xf32, #tpu.memory_space<vmem>>, %arg7: memref<2x8x32xf32, #tpu.memory_space<vmem>>) attributes {dimension_semantics = [], scalar_prefetch = 0 : i64, scratch_operands = 0 : i64, tpu.core_type = #tpu.core_type<tc>} {
    %c0 = arith.constant 0 : index
    %c0_0 = arith.constant 0 : index
    %0 = vector.load %arg0[%c0, %c0_0] : memref<16x1xi32, #tpu.memory_space<vmem>>, vector<16x1xi32>
    %c0_1 = arith.constant 0 : index
    %c0_2 = arith.constant 0 : index
    %1 = vector.load %arg1[%c0_1, %c0_2] : memref<16x1xi32, #tpu.memory_space<vmem>>, vector<16x1xi32>
    %2 = tpu.iota {dimensions = array<i32: 1>} : vector<16x100xi32>
    %3 = vector.broadcast %0 : vector<16x1xi32> to vector<16x100xi32>
    %4 = arith.cmpi eq, %2, %3 : vector<16x100xi32>
    %5 = arith.extui %4 : vector<16x100xi1> to vector<16x100xi32>
    %6 = arith.sitofp %5 : vector<16x100xi32> to vector<16x100xf32>
    %7 = tpu.iota {dimensions = array<i32: 1>} : vector<16x64xi32>
    %8 = vector.broadcast %1 : vector<16x1xi32> to vector<16x64xi32>
    %9 = arith.cmpi eq, %7, %8 : vector<16x64xi32>
    %10 = arith.extui %9 : vector<16x64xi1> to vector<16x64xi32>
    %11 = arith.sitofp %10 : vector<16x64xi32> to vector<16x64xf32>
    %c0_3 = arith.constant 0 : index
    %c0_4 = arith.constant 0 : index
    %12 = vector.load %arg2[%c0_3, %c0_4] : memref<100x32xf32, #tpu.memory_space<vmem>>, vector<100x32xf32>
    %cst = arith.constant dense<0.000000e+00> : vector<16x32xf32>
    %13 = tpu.matmul %6, %12, %cst {dimension_numbers = #tpu.dot_dimension_numbers<[1], [0], [0], [1], [0, 0, 1, 1], [], []>} : vector<16x100xf32>, vector<100x32xf32>, vector<16x32xf32> -> vector<16x32xf32>
    %c0_5 = arith.constant 0 : index
    %c0_6 = arith.constant 0 : index
    %14 = vector.load %arg3[%c0_5, %c0_6] : memref<64x32xf32, #tpu.memory_space<vmem>>, vector<64x32xf32>
    %cst_7 = arith.constant dense<0.000000e+00> : vector<16x32xf32>
    %15 = tpu.matmul %11, %14, %cst_7 {dimension_numbers = #tpu.dot_dimension_numbers<[1], [0], [0], [1], [0, 0, 1, 1], [], []>} : vector<16x64xf32>, vector<64x32xf32>, vector<16x32xf32> -> vector<16x32xf32>
    %16 = arith.addf %13, %15 : vector<16x32xf32>
    %c0_8 = arith.constant 0 : index
    %c0_9 = arith.constant 0 : index
    %17 = vector.load %arg4[%c0_8, %c0_9] : memref<1x32xf32, #tpu.memory_space<vmem>>, vector<1x32xf32>
    %18 = vector.broadcast %17 : vector<1x32xf32> to vector<16x32xf32>
    %19 = arith.addf %16, %18 : vector<16x32xf32>
    %c0_10 = arith.constant 0 : index
    %c0_11 = arith.constant 0 : index
    %20 = vector.load %arg5[%c0_10, %c0_11] : memref<1x32xf32, #tpu.memory_space<vmem>>, vector<1x32xf32>
    %c0_12 = arith.constant 0 : index
    %c0_13 = arith.constant 0 : index
    %21 = vector.load %arg6[%c0_12, %c0_13] : memref<1x32xf32, #tpu.memory_space<vmem>>, vector<1x32xf32>
    %cst_14 = arith.constant dense<0.000000e+00> : vector<16xf32>
    %22 = vector.multi_reduction <add>, %19, %cst_14 [1] : vector<16x32xf32> to vector<16xf32>
    %23 = vector.shape_cast %22 : vector<16xf32> to vector<16x1xf32>
    %cst_15 = arith.constant 3.200000e+01 : f32
    %24 = vector.broadcast %cst_15 : f32 to vector<16x1xf32>
    %25 = arith.divf %23, %24 : vector<16x1xf32>
    %26 = vector.broadcast %25 : vector<16x1xf32> to vector<16x32xf32>
    %27 = arith.subf %19, %26 : vector<16x32xf32>
    %28 = arith.mulf %27, %27 : vector<16x32xf32>
    %cst_16 = arith.constant dense<0.000000e+00> : vector<16xf32>
    %29 = vector.multi_reduction <add>, %28, %cst_16 [1] : vector<16x32xf32> to vector<16xf32>
    %30 = vector.shape_cast %29 : vector<16xf32> to vector<16x1xf32>
    %cst_17 = arith.constant 3.200000e+01 : f32
    %31 = vector.broadcast %cst_17 : f32 to vector<16x1xf32>
    %32 = arith.divf %30, %31 : vector<16x1xf32>
    %33 = vector.broadcast %25 : vector<16x1xf32> to vector<16x32xf32>
    %34 = arith.subf %19, %33 : vector<16x32xf32>
    %cst_18 = arith.constant 9.99999974E-6 : f32
    %35 = vector.broadcast %cst_18 : f32 to vector<16x1xf32>
    %36 = arith.addf %32, %35 : vector<16x1xf32>
    %37 = math.rsqrt %36 : vector<16x1xf32>
    %38 = vector.broadcast %37 : vector<16x1xf32> to vector<16x32xf32>
    %39 = arith.mulf %34, %38 : vector<16x32xf32>
    %40 = vector.broadcast %20 : vector<1x32xf32> to vector<16x32xf32>
    %41 = arith.mulf %39, %40 : vector<16x32xf32>
    %42 = vector.broadcast %21 : vector<1x32xf32> to vector<16x32xf32>
    %43 = arith.addf %41, %42 : vector<16x32xf32>
    %44 = vector.shape_cast %43 : vector<16x32xf32> to vector<2x8x32xf32>
    %c0_19 = arith.constant 0 : index
    %c0_20 = arith.constant 0 : index
    %c0_21 = arith.constant 0 : index
    %45 = vector.load %arg7[%c0_19, %c0_20, %c0_21] : memref<2x8x32xf32, #tpu.memory_space<vmem>>, vector<2x8x32xf32>
    tpu.vector_store %arg7[%c0_19, %c0_20, %c0_21], %44 {strides = array<i32>} : memref<2x8x32xf32, #tpu.memory_space<vmem>>, vector<2x8x32xf32>,
    return
  }
}

</mosaic_0001>

<llo_original>
// kernel: tpu_custom_call.1
$region0: #{tpu_custom_call.1}
  #allocation0 [shape = 'u32[]', space=smem, size = 0x4, offset = 0x4, fixed_abs, tag = 'smem constant byte address 0x4 - core index']
  #allocation1 [shape = 'u32[144,128]{1,0:T(1,128)}', space=vmem, size = 0x12000, scoped, tag = 'internal scratch']
  %s0 = inlined_call_operand.vmem [shape: s32[16,1], index: 0, kind: input, shape index: {}]
  %s1 = inlined_call_operand.vmem [shape: s32[16,1], index: 1, kind: input, shape index: {}]
  %s2 = inlined_call_operand.vmem [shape: f32[100,32], index: 2, kind: input, shape index: {}]
  %s3 = inlined_call_operand.vmem [shape: f32[64,32], index: 3, kind: input, shape index: {}]
  %s4 = inlined_call_operand.vmem [shape: f32[1,32], index: 4, kind: input, shape index: {}]
  %s5 = inlined_call_operand.vmem [shape: f32[1,32], index: 5, kind: input, shape index: {}]
  %s6 = inlined_call_operand.vmem [shape: f32[1,32], index: 6, kind: input, shape index: {}]
  %s7 = inlined_call_operand.hbm [shape: f32[2,8,32], index: 7, kind: output, shape index: {}]
  %s8 = sld [smem:[#allocation0]]
  $region38: #{tpu_custom_call.1} parent=0
    _
  %s10 = ssub.s32 1, %s8
  %s11 = scalar_select 0, %s10, %s8
  $region1: #{tpu_custom_call.1} parent=0
    #allocation2 [shape = 'u8[8192]{0}', space=vmem, size = 0x2000, scoped, tag = 'output window, operand 0, single buffered']
    #allocation3 [shape = 's32[1]{0}', space=sflag, size = 0x4, scoped, tag = 'scoped memory for tpu_custom_call.1']
    %12 = vsyncpa [#allocation3], 0
    // Predicated region
    $region2: #{tpu_custom_call.1} parent=1 // pred_check
      _
    $region3: #{tpu_custom_call.1} parent=1 // pred_check_branch
      %14 = sbr.rel (0) target = $region5
    $region4: #{tpu_custom_call.1} parent=1 // pred_region
      _
    $region5: #{tpu_custom_call.1} parent=1 // pred_fallthru
      _
    // Predicated region
    $region6: #{tpu_custom_call.1} parent=1 // pred_check
      _
    $region7: #{tpu_custom_call.1} parent=1 // pred_check_branch
      %16 = sbr.rel (0) target = $region9
    $region8: #{tpu_custom_call.1} parent=1 // pred_region
      _
    $region9: #{tpu_custom_call.1} parent=1 // pred_fallthru
      _
    // Predicated region
    $region10: #{tpu_custom_call.1} parent=1 // pred_check
      _
    $region11: #{tpu_custom_call.1} parent=1 // pred_check_branch
      %18 = sbr.rel (0) target = $region13
    $region12: #{tpu_custom_call.1} parent=1 // pred_region
      _
    $region13: #{tpu_custom_call.1} parent=1 // pred_fallthru
      _
    // Predicated region
    $region14: #{tpu_custom_call.1} parent=1 // pred_check
      _
    $region15: #{tpu_custom_call.1} parent=1 // pred_check_branch
      %20 = sbr.rel (0) target = $region17
    $region16: #{tpu_custom_call.1} parent=1 // pred_region
      _
    $region17: #{tpu_custom_call.1} parent=1 // pred_fallthru
      _
    // Predicated region
    $region18: #{tpu_custom_call.1} parent=1 // pred_check
      _
    $region19: #{tpu_custom_call.1} parent=1 // pred_check_branch
      %22 = sbr.rel (0) target = $region21
    $region20: #{tpu_custom_call.1} parent=1 // pred_region
      _
    $region21: #{tpu_custom_call.1} parent=1 // pred_fallthru
      _
    // Predicated region
    $region22: #{tpu_custom_call.1} parent=1 // pred_check
      _
    $region23: #{tpu_custom_call.1} parent=1 // pred_check_branch
      %24 = sbr.rel (0) target = $region25
    $region24: #{tpu_custom_call.1} parent=1 // pred_region
      _
    $region25: #{tpu_custom_call.1} parent=1 // pred_fallthru
      _
    // Predicated region
    $region26: #{tpu_custom_call.1} parent=1 // pred_check
      _
    $region27: #{tpu_custom_call.1} parent=1 // pred_check_branch
      %26 = sbr.rel (0) target = $region29
    $region28: #{tpu_custom_call.1} parent=1 // pred_region
      _
    $region29: #{tpu_custom_call.1} parent=1 // pred_fallthru
      _
    %v27 = vld [vmem:[%s0] sm:$0xff]
    %v28 = vld [vmem:[%s0 + $0x8] sm:$0xff]
    %v29 = vld [vmem:[%s1] sm:$0xff]
    %v30 = vld [vmem:[%s1 + $0x8] sm:$0xff]
    %v31 = vlaneseq
    %v32 = vand.u32 %v31, 127
    %33 = vset.pattern.permute.xlu0 0
    %34 = vperm.xlu0 %33, %v27
    %v35 = vpop.permute.xlu0 %34
    %36 = vset.pattern.permute.xlu0 0
    %37 = vperm.xlu0 %36, %v28
    %v38 = vpop.permute.xlu0 %37
    %vm39 = vcmp.eq.s32.totalorder %v32, %v35
    %vm40 = vcmp.eq.s32.totalorder %v32, %v38
    %v41 = vsel %vm39, 1, 0
    %v42 = vsel %vm40, 1, 0
    %v43 = vcvt.s32.f32 %v41
    %v44 = vcvt.s32.f32 %v42
    %45 = vset.pattern.permute.xlu0 0
    %46 = vperm.xlu0 %45, %v29
    %v47 = vpop.permute.xlu0 %46
    %48 = vset.pattern.permute.xlu0 0
    %49 = vperm.xlu0 %48, %v30
    %v50 = vpop.permute.xlu0 %49
    %vm51 = vcmp.eq.s32.totalorder %v32, %v47
    %vm52 = vcmp.eq.s32.totalorder %v32, %v50
    %v53 = vsel %vm51, 1, 0
    %v54 = vsel %vm52, 1, 0
    %v55 = vcvt.s32.f32 %v53
    %v56 = vcvt.s32.f32 %v54
    %v57 = vld [vmem:[%s2] sm:$0xff]
    %v58 = vld [vmem:[%s2 + $0x8] sm:$0xff]
    %v59 = vld [vmem:[%s2 + $0x10] sm:$0xff]
    %v60 = vld [vmem:[%s2 + $0x18] sm:$0xff]
    %v61 = vld [vmem:[%s2 + $0x20] sm:$0xff]
    %v62 = vld [vmem:[%s2 + $0x28] sm:$0xff]
    %v63 = vld [vmem:[%s2 + $0x30] sm:$0xff]
    %v64 = vld [vmem:[%s2 + $0x38] sm:$0xff]
    %v65 = vld [vmem:[%s2 + $0x40] sm:$0xff]
    %v66 = vld [vmem:[%s2 + $0x48] sm:$0xff]
    %v67 = vld [vmem:[%s2 + $0x50] sm:$0xff]
    %v68 = vld [vmem:[%s2 + $0x58] sm:$0xff]
    %v69 = vld [vmem:[%s2 + $0x60] sm:$0xf]
    %v70 = vld [vmem:[%s3] sm:$0xff]
    %v71 = vld [vmem:[%s3 + $0x8] sm:$0xff]
    %v72 = vld [vmem:[%s3 + $0x10] sm:$0xff]
    %v73 = vld [vmem:[%s3 + $0x18] sm:$0xff]
    %v74 = vld [vmem:[%s3 + $0x20] sm:$0xff]
    %v75 = vld [vmem:[%s3 + $0x28] sm:$0xff]
    %v76 = vld [vmem:[%s3 + $0x30] sm:$0xff]
    %v77 = vld [vmem:[%s3 + $0x38] sm:$0xff]
    %vm78 = vcmask 523264
    %v80 = vsel %vm78, %v55, 0
    %v83 = vsel %vm78, %v56, 0
    %85 = vmatprep.subr.mxu0 0.0
    %86 = vmatpush1.msra.mxu0 %v70
    %87 = vmatprep.subr.mxu0 0.0
    %88 = vmatpush1.msra.mxu0 %v71
    %89 = vmatprep.subr.mxu0 0.0
    %90 = vmatpush1.msra.mxu0 %v72
    %91 = vmatprep.subr.mxu0 0.0
    %92 = vmatpush1.msra.mxu0 %v73
    %93 = vmatprep.subr.mxu0 0.0
    %94 = vmatpush1.msra.mxu0 %v74
    %95 = vmatprep.subr.mxu0 0.0
    %96 = vmatpush1.msra.mxu0 %v75
    %97 = vmatprep.subr.mxu0 0.0
    %98 = vmatpush1.msra.mxu0 %v76
    %99 = vmatprep.subr.mxu0 0.0
    %100 = vmatpush1.msra.mxu0 %v77
    %101 = vmatprep.subr.mxu0 0.0
    %102 = vmatpush1.msra.mxu0 0.0
    %103 = vmatprep.subr.mxu0 0.0
    %104 = vmatpush1.msra.mxu0 0.0
    %105 = vmatprep.subr.mxu0 0.0
    %106 = vmatpush1.msra.mxu0 0.0
    %107 = vmatprep.subr.mxu0 0.0
    %108 = vmatpush1.msra.mxu0 0.0
    %109 = vmatprep.subr.mxu0 0.0
    %110 = vmatpush1.msra.mxu0 0.0
    %111 = vmatprep.subr.mxu0 0.0
    %112 = vmatpush1.msra.mxu0 0.0
    %113 = vmatprep.subr.mxu0 0.0
    %114 = vmatpush1.msra.mxu0 0.0
    %115 = vmatprep.subr.mxu0 0.0
    %116 = vmatpush1.msra.mxu0 0.0
    %117 = vmatprep.subr.mxu0 0.0
    %118 = vmatpush1.msra.mxu0 0.0
    %119 = vmatprep.subr.mxu0 0.0
    %120 = vmatpush1.msra.mxu0 0.0
    %121 = vmatprep.subr.mxu0 0.0
    %122 = vmatpush1.msra.mxu0 0.0
    %123 = vmatprep.subr.mxu0 0.0
    %124 = vmatpush1.msra.mxu0 0.0
    %125 = vmatprep.subr.mxu0 0.0
    %126 = vmatpush1.msra.mxu0 0.0
    %127 = vmatprep.subr.mxu0 0.0
    %128 = vmatpush1.msra.mxu0 0.0
    %129 = vmatprep.subr.mxu0 0.0
    %130 = vmatpush1.msra.mxu0 0.0
    %131 = vmatprep.subr.mxu0 0.0
    %132 = vmatpush1.msra.mxu0 0.0
    %133 = vmatprep.subr.mxu0 0.0
    %134 = vmatpush1.msra.mxu0 0.0
    %135 = vmatprep.subr.mxu0 0.0
    %136 = vmatpush1.msra.mxu0 0.0
    %137 = vmatprep.subr.mxu0 0.0
    %138 = vmatpush1.msra.mxu0 0.0
    %139 = vmatprep.subr.mxu0 0.0
    %140 = vmatpush1.msra.mxu0 0.0
    %141 = vmatprep.subr.mxu0 0.0
    %142 = vmatpush1.msra.mxu0 0.0
    %143 = vmatprep.subr.mxu0 0.0
    %144 = vmatpush1.msra.mxu0 0.0
    %145 = vmatprep.subr.mxu0 0.0
    %146 = vmatpush1.msra.mxu0 0.0
    %147 = vmatprep.subr.mxu0 0.0
    %148 = vmatpush1.msra.mxu0 0.0
    %149 = vmatprep.mubr.f32.mxu0 0.0
    %150 = vmatmul.mubr.f32.gmra.mrb[0].mxu0 %v80
    %v151 = vpop.f32.mrb[0].mxu0
    %v152 = vadd.f32 0.0, %v151
    %v153 = vpop.f32.mrb[0].mxu0
    %154 = vmatprep.mubr.f32.mxu0 0.0
    %155 = vmatmul.mubr.f32.gmra.mrb[0].mxu0 %v83
    %v156 = vpop.f32.mrb[0].mxu0
    %v157 = vadd.f32 0.0, %v156
    %v158 = vpop.f32.mrb[0].mxu0
    %159 = vdwg.mxu0
    %vm160 = vcmask 818176
    %v162 = vsel %vm160, %v43, 0
    %v165 = vsel %vm160, %v44, 0
    %vm167 = vcmask 1043456
    %v169 = vsel %vm167, %v69, 0
    %171 = vmatprep.subr.mxu0 0.0
    %172 = vmatpush1.msra.mxu0 %v57
    %173 = vmatprep.subr.mxu0 0.0
    %174 = vmatpush1.msra.mxu0 %v58
    %175 = vmatprep.subr.mxu0 0.0
    %176 = vmatpush1.msra.mxu0 %v59
    %177 = vmatprep.subr.mxu0 0.0
    %178 = vmatpush1.msra.mxu0 %v60
    %179 = vmatprep.subr.mxu0 0.0
    %180 = vmatpush1.msra.mxu0 %v61
    %181 = vmatprep.subr.mxu0 0.0
    %182 = vmatpush1.msra.mxu0 %v62
    %183 = vmatprep.subr.mxu0 0.0
    %184 = vmatpush1.msra.mxu0 %v63
    %185 = vmatprep.subr.mxu0 0.0
    %186 = vmatpush1.msra.mxu0 %v64
    %187 = vmatprep.subr.mxu0 0.0
    %188 = vmatpush1.msra.mxu0 %v65
    %189 = vmatprep.subr.mxu0 0.0
    %190 = vmatpush1.msra.mxu0 %v66
    %191 = vmatprep.subr.mxu0 0.0
    %192 = vmatpush1.msra.mxu0 %v67
    %193 = vmatprep.subr.mxu0 0.0
    %194 = vmatpush1.msra.mxu0 %v68
    %195 = vmatprep.subr.mxu0 0.0
    %196 = vmatpush1.msra.mxu0 %v169
    %197 = vmatprep.subr.mxu0 0.0
    %198 = vmatpush1.msra.mxu0 0.0
    %199 = vmatprep.subr.mxu0 0.0
    %200 = vmatpush1.msra.mxu0 0.0
    %201 = vmatprep.subr.mxu0 0.0
    %202 = vmatpush1.msra.mxu0 0.0
    %203 = vmatprep.subr.mxu0 0.0
    %204 = vmatpush1.msra.mxu0 0.0
    %205 = vmatprep.subr.mxu0 0.0
    %206 = vmatpush1.msra.mxu0 0.0
    %207 = vmatprep.subr.mxu0 0.0
    %208 = vmatpush1.msra.mxu0 0.0
    %209 = vmatprep.subr.mxu0 0.0
    %210 = vmatpush1.msra.mxu0 0.0
    %211 = vmatprep.subr.mxu0 0.0
    %212 = vmatpush1.msra.mxu0 0.0
    %213 = vmatprep.subr.mxu0 0.0
    %214 = vmatpush1.msra.mxu0 0.0
    %215 = vmatprep.subr.mxu0 0.0
    %216 = vmatpush1.msra.mxu0 0.0
    %217 = vmatprep.subr.mxu0 0.0
    %218 = vmatpush1.msra.mxu0 0.0
    %219 = vmatprep.subr.mxu0 0.0
    %220 = vmatpush1.msra.mxu0 0.0
    %221 = vmatprep.subr.mxu0 0.0
    %222 = vmatpush1.msra.mxu0 0.0
    %223 = vmatprep.subr.mxu0 0.0
    %224 = vmatpush1.msra.mxu0 0.0
    %225 = vmatprep.subr.mxu0 0.0
    %226 = vmatpush1.msra.mxu0 0.0
    %227 = vmatprep.subr.mxu0 0.0
    %228 = vmatpush1.msra.mxu0 0.0
    %229 = vmatprep.subr.mxu0 0.0
    %230 = vmatpush1.msra.mxu0 0.0
    %231 = vmatprep.subr.mxu0 0.0
    %232 = vmatpush1.msra.mxu0 0.0
    %233 = vmatprep.subr.mxu0 0.0
    %234 = vmatpush1.msra.mxu0 0.0
    %235 = vmatprep.mubr.f32.mxu0 0.0
    %236 = vmatmul.mubr.f32.gmra.mrb[0].mxu0 %v162
    %v237 = vpop.f32.mrb[0].mxu0
    %v238 = vadd.f32 %v152, %v237
    %v239 = vpop.f32.mrb[0].mxu0
    %240 = vmatprep.mubr.f32.mxu0 0.0
    %241 = vmatmul.mubr.f32.gmra.mrb[0].mxu0 %v165
    %v242 = vpop.f32.mrb[0].mxu0
    %v243 = vadd.f32 %v157, %v242
    %v244 = vpop.f32.mrb[0].mxu0
    %245 = vdwg.mxu0
    %v246 = vld [vmem:[%s4] sm:$0x1]
    %v248 = vlaneseq
    %v249 = vshrl.u32 %v248, 7
    %v250 = vsub.s32 0, %v249
    %v251 = vrot.slane %v246, %v250
    %v253 = vadd.f32 %v238, %v251
    %v254 = vadd.f32 %v243, %v251
    %v255 = vld [vmem:[%s5] sm:$0x1]
    %v256 = vld [vmem:[%s6] sm:$0x1]
    %vm257 = vcmask 261120
    %v258 = vsel %vm257, %v253, 0.0
    %259 = vadd.xlane.f32.xlu0 %v258
    %v260 = vpop.xlane.xlu0 %259
    %v261 = vsel %vm257, %v254, 0.0
    %262 = vadd.xlane.f32.xlu0 %v261
    %v263 = vpop.xlane.xlu0 %262
    %v264 = vrcp.pop 32.0
    %v265 = vmul.f32 %v260, %v264
    %v266 = vmul.f32 %v263, %v264
    %v267 = vsub.f32 %v253, %v265
    %v268 = vsub.f32 %v254, %v266
    %v269 = vmul.f32 %v267, %v267
    %v270 = vmul.f32 %v268, %v268
    %v271 = vsel %vm257, %v269, 0.0
    %272 = vadd.xlane.f32.xlu0 %v271
    %v273 = vpop.xlane.xlu0 %272
    %v274 = vsel %vm257, %v270, 0.0
    %275 = vadd.xlane.f32.xlu0 %v274
    %v276 = vpop.xlane.xlu0 %275
    %v277 = vmul.f32 %v273, %v264
    %v278 = vmul.f32 %v276, %v264
    %v279 = vadd.f32 %v277, 1e-05
    %v280 = vadd.f32 %v278, 1e-05
    %v281 = vrsqrt.pop %v279
    %v282 = vrsqrt.pop %v280
    %v283 = vmul.f32 %v267, %v281
    %v284 = vmul.f32 %v268, %v282
    %v286 = vlaneseq
    %v287 = vshrl.u32 %v286, 7
    %v288 = vsub.s32 0, %v287
    %v289 = vrot.slane %v255, %v288
    %v291 = vmul.f32 %v283, %v289
    %v292 = vmul.f32 %v284, %v289
    %v294 = vlaneseq
    %v295 = vshrl.u32 %v294, 7
    %v296 = vsub.s32 0, %v295
    %v297 = vrot.slane %v256, %v296
    %v299 = vadd.f32 %v291, %v297
    %v300 = vadd.f32 %v292, %v297
    %301 = vst.msk [vmem:[#allocation2] sm:$0xff] %vm257, %v299
    %302 = vst.msk [vmem:[#allocation2 + $0x8] sm:$0xff] %vm257, %v300
    // Predicated region
    $region30: #{tpu_custom_call.1} parent=1 // pred_check
      _
    $region31: #{tpu_custom_call.1} parent=1 // pred_check_branch
      %304 = sbr.rel (0) target = $region33
    $region32: #{tpu_custom_call.1} parent=1 // pred_region
      %s306 = ssub.s32 256, 256
      %307 = vsyncadd [#allocation3], %s306
      %s308 = sshll.u32 [#allocation2], 4
      %s309 = int_to_ptr.vmem [resolvable:$true] %s308
      %314 = dma.vmem_to_hbm [thread:$0]  %s309, 256, %s7, [#allocation3], 128, 128, 8
    $region33: #{tpu_custom_call.1} parent=1 // pred_fallthru
      _
    // Predicated region
    $region34: #{tpu_custom_call.1} parent=1 // pred_check
      _
    $region35: #{tpu_custom_call.1} parent=1 // pred_check_branch
      %316 = sbr.rel (0) target = $region37
    $region36: #{tpu_custom_call.1} parent=1 // pred_region
      %317 = dma.done [#allocation3], 256
    $region37: #{tpu_custom_call.1} parent=1 // pred_fallthru
      _
    %318 = vsyncpa [#allocation3], 1

</llo_original>
